<compile_context>
chip_gen: v7x
topology: tpu7x:2x2x1
jax: 0.10.0
libtpu: 0.0.40
codegen_flags: <defaults>
</compile_context>

<pallas_src>
import math

import jax
import jax.numpy as jnp
from jax.experimental import pallas as pl
from jax.experimental.pallas import tpu as pltpu

_LOG2 = math.log(2.0)
_SOFTPLUS_THRESHOLD = 20.0            # matches torch's default threshold
_TILE_BYTES_TARGET = 2 * 1024 * 1024  # ~2 MiB block; x4 (in/out, double-buffered)
                                      # = ~8 MiB VMEM -> fits v5e/v6e/v7x defaults.


def _ssp_kernel(x_ref, o_ref):
    x = x_ref[...]
    # Numerically stable softplus, matching torch's threshold behaviour:
    #   softplus(x) = x               if x > 20
    #               = log1p(exp(x))   otherwise
    x_clamped = jnp.minimum(x, _SOFTPLUS_THRESHOLD)
    sp = jnp.where(x > _SOFTPLUS_THRESHOLD, x, jnp.log1p(jnp.exp(x_clamped)))
    o_ref[...] = (sp - jnp.asarray(_LOG2, dtype=x.dtype)).astype(o_ref.dtype)


def _run_2d(x2d: jax.Array) -> jax.Array:
    """Run the elementwise kernel over a lane-dense (rows, lanes) slab."""
    rows, lanes = x2d.shape
    itemsize = jnp.dtype(x2d.dtype).itemsize

    # ~2 MiB tiles, tile_rows a multiple of 8 (sublane).
    target_rows = max(8, (_TILE_BYTES_TARGET // (lanes * itemsize)) // 8 * 8)
    if rows <= target_rows:
        # Single block covering the whole rows dim (full-extent dims are legal).
        tile_rows = rows
        grid = (1,)
    else:
        # Constant full-size blocks; Pallas masks the partial trailing block,
        # so the tile never silently shrinks for awkward row counts.
        tile_rows = target_rows
        grid = (pl.cdiv(rows, tile_rows),)

    return pl.pallas_call(
        _ssp_kernel,
        out_shape=jax.ShapeDtypeStruct((rows, lanes), x2d.dtype),
        grid_spec=pltpu.PrefetchScalarGridSpec(
            num_scalar_prefetch=0,
            grid=grid,
            in_specs=[pl.BlockSpec((tile_rows, lanes), lambda i: (i, 0))],
            out_specs=pl.BlockSpec((tile_rows, lanes), lambda i: (i, 0)),
        ),
        compiler_params=pltpu.CompilerParams(
            dimension_semantics=("parallel",),
        ),
    )(x2d)


def shifted_soft_plus(x: jax.Array) -> jax.Array:
    """Apply shifted softplus elementwise via a Pallas TPU kernel."""
    orig_shape = x.shape
    n = x.size
    if n == 0:
        return x

    flat = x.reshape(-1)

    # Fast path: widest lane count (multiple of 128) that divides n exactly
    # -> pure reshape, no pad / slice HBM copies around the kernel.
    for lanes in (1024, 512, 256, 128):
        if n % lanes == 0:
            out2d = _run_2d(flat.reshape(n // lanes, lanes))
            return out2d.reshape(orig_shape)

    # Slow path (n not a multiple of 128): pad the tail of the last row only.
    lanes = 128
    padded_n = pl.cdiv(n, lanes) * lanes
    flat = jnp.pad(flat, (0, padded_n - n))
    out2d = _run_2d(flat.reshape(padded_n // lanes, lanes))
    return out2d.reshape(-1)[:n].reshape(orig_shape)


if __name__ == "__main__":
    key = jax.random.PRNGKey(0)

    # Small NCHW-like input consistent with a conv-style feature map.
    x = jax.random.normal(key, (2, 4, 16, 16), dtype=jnp.float32) * 5.0
    out = jax.block_until_ready(shifted_soft_plus(x))
    ref = jax.nn.softplus(x) - jnp.log(2.0)
    assert out.shape == x.shape and out.dtype == x.dtype
    assert jnp.max(jnp.abs(out - ref)) < 1e-5

    # Exercise the padded slow path (size not a multiple of 128).
    y = jax.random.normal(jax.random.PRNGKey(1), (7, 33), dtype=jnp.float32) * 30.0
    out_y = jax.block_until_ready(shifted_soft_plus(y))
    ref_y = jax.nn.softplus(y) - jnp.log(2.0)
    assert out_y.shape == y.shape and out_y.dtype == y.dtype
    assert jnp.max(jnp.abs(out_y - ref_y)) < 1e-5

    print("KERNEL_OK")
</pallas_src>

<mosaic_0001>
module attributes {stable_mosaic.version = 11 : i64} {
  func.func @_ssp_kernel(%arg0: i32, %arg1: memref<2x1024xf32, #tpu.memory_space<vmem>>, %arg2: memref<2x1024xf32, #tpu.memory_space<vmem>>) attributes {dimension_semantics = [#tpu.dimension_semantics<parallel>], iteration_bounds = array<i64: 1>, scalar_prefetch = 0 : i64, scratch_operands = 0 : i64, tpu.core_type = #tpu.core_type<tc>, window_params = [{transform_indices = @transform_0, window_bounds = array<i64: 2, 1024>}, {transform_indices = @transform_1, window_bounds = array<i64: 2, 1024>}]} {
    %c0 = arith.constant 0 : index
    %c0_0 = arith.constant 0 : index
    %0 = vector.load %arg1[%c0, %c0_0] : memref<2x1024xf32, #tpu.memory_space<vmem>>, vector<2x1024xf32>
    %cst = arith.constant 2.000000e+01 : f32
    %1 = vector.broadcast %cst : f32 to vector<2x1024xf32>
    %2 = arith.minimumf %0, %1 : vector<2x1024xf32>
    %cst_1 = arith.constant 2.000000e+01 : f32
    %3 = vector.broadcast %cst_1 : f32 to vector<2x1024xf32>
    %4 = arith.cmpf ogt, %0, %3 : vector<2x1024xf32>
    %5 = math.exp %2 : vector<2x1024xf32>
    %6 = math.log1p %5 : vector<2x1024xf32>
    %7 = arith.select %4, %0, %6 : vector<2x1024xi1>, vector<2x1024xf32>
    %cst_2 = arith.constant 0.693147182 : f32
    %8 = vector.broadcast %cst_2 : f32 to vector<2x1024xf32>
    %9 = arith.subf %7, %8 : vector<2x1024xf32>
    %c0_3 = arith.constant 0 : index
    %c0_4 = arith.constant 0 : index
    %10 = vector.load %arg2[%c0_3, %c0_4] : memref<2x1024xf32, #tpu.memory_space<vmem>>, vector<2x1024xf32>
    tpu.vector_store %arg2[%c0_3, %c0_4], %9 {strides = array<i32>} : memref<2x1024xf32, #tpu.memory_space<vmem>>, vector<2x1024xf32>,
    return
  }
  func.func @transform_0(%arg0: i32) -> (i32, i32) {
    %c0_i32 = arith.constant 0 : i32
    %c0_i32_0 = arith.constant 0 : i32
    return %arg0, %c0_i32 : i32, i32
  }
  func.func @transform_1(%arg0: i32) -> (i32, i32) {
    %c0_i32 = arith.constant 0 : i32
    %c0_i32_0 = arith.constant 0 : i32
    return %arg0, %c0_i32 : i32, i32
  }
}

</mosaic_0001>

<llo_original>
// kernel: tpu_custom_call.1
$region0: #{tpu_custom_call.1}
  #allocation0 [shape = 'u32[]', space=smem, size = 0x4, offset = 0x4, fixed_abs, tag = 'smem constant byte address 0x4 - core index']
  #allocation1 [shape = 'u32[144,128]{1,0:T(1,128)}', space=vmem, size = 0x12000, scoped, tag = 'internal scratch']
  %s0 = inlined_call_operand.hbm [shape: f32[2,1024], index: 0, kind: input, shape index: {}]
  %s1 = inlined_call_operand.hbm [shape: f32[2,1024], index: 1, kind: output, shape index: {}]
  %s2 = sld [smem:[#allocation0]]
  $region18: #{tpu_custom_call.1} parent=0
    _
  %s4 = ssub.s32 1, %s2
  %s5 = scalar_select 0, %s4, %s2
  $region1: #{tpu_custom_call.1} parent=0
    #allocation2 [shape = 'u8[8192]{0}', space=vmem, size = 0x2000, scoped, tag = 'input window, operand 0, single buffered']
    #allocation3 [shape = 's32[1]{0}', space=sflag, size = 0x4, scoped, tag = 'scoped memory for tpu_custom_call.1']
    #allocation4 [shape = 's32[1]{0}', space=sflag, size = 0x4, scoped, tag = 'scoped memory for tpu_custom_call.1']
    #allocation5 [shape = 'u8[8192]{0}', space=vmem, size = 0x2000, scoped, tag = 'output window, operand 0, single buffered']
    %6 = vsyncpa [#allocation3], 0
    %7 = vsyncpa [#allocation4], 0
    // Predicated region
    $region2: #{tpu_custom_call.1} parent=1 // pred_check
      _
    $region3: #{tpu_custom_call.1} parent=1 // pred_check_branch
      %9 = sbr.rel (0) target = $region5
    $region4: #{tpu_custom_call.1} parent=1 // pred_region
      %s11 = ssub.s32 256, 256
      %12 = vsyncadd [#allocation3], %s11
      %s14 = sshll.u32 [#allocation2], 4
      %s15 = int_to_ptr.vmem [resolvable:$true] %s14
      %17 = dma.hbm_to_vmem [thread:$0]  %s0, 256, %s15, [#allocation3]
    $region5: #{tpu_custom_call.1} parent=1 // pred_fallthru
      _
    // Predicated region
    $region6: #{tpu_custom_call.1} parent=1 // pred_check
      _
    $region7: #{tpu_custom_call.1} parent=1 // pred_check_branch
      %19 = sbr.rel (0) target = $region9
    $region8: #{tpu_custom_call.1} parent=1 // pred_region
      %20 = dma.done [#allocation3], 256
    $region9: #{tpu_custom_call.1} parent=1 // pred_fallthru
      _
    %v21 = vld [vmem:[#allocation2] sm:$0xff]
    %v22 = vld [vmem:[#allocation2 + $0x8] sm:$0xff]
    %v23 = vmin.f32 %v21, 20.0
    %v24 = vmin.f32 %v22, 20.0
    %vm25 = vcmp.gt.f32.partialorder %v21, 20.0
    %vm26 = vcmp.gt.f32.partialorder %v22, 20.0
    %v27 = vmul.f32 %v23, 1.442695
    %v28 = vpow.pop %v27
    %v29 = vmul.f32 %v24, 1.442695
    %v30 = vpow.pop %v29
    %v31 = vadd.f32 %v28, 1.0
    %v32 = vlog2.pop %v31
    %v33 = vmul.f32 %v32, 0.6931472
    %v34 = vmul.f32 -0.5, %v28
    %v35 = vadd.f32 %v34, 1.0
    %v36 = vmul.f32 %v35, %v28
    %v37 = vand.u32 2147483647, %v28
    %vm38 = vcmp.lt.f32.partialorder %v37, 0.0004427343
    %v39 = vsel %vm38, %v36, %v33
    %v40 = vadd.f32 %v30, 1.0
    %v41 = vlog2.pop %v40
    %v42 = vmul.f32 %v41, 0.6931472
    %v43 = vmul.f32 -0.5, %v30
    %v44 = vadd.f32 %v43, 1.0
    %v45 = vmul.f32 %v44, %v30
    %v46 = vand.u32 2147483647, %v30
    %vm47 = vcmp.lt.f32.partialorder %v46, 0.0004427343
    %v48 = vsel %vm47, %v45, %v42
    %v49 = vsel %vm25, %v21, %v39
    %v50 = vsel %vm26, %v22, %v48
    %v51 = vsub.f32 %v49, 0.6931472
    %v52 = vsub.f32 %v50, 0.6931472
    %53 = vst [vmem:[#allocation5] sm:$0xff] %v51
    %54 = vst [vmem:[#allocation5 + $0x8] sm:$0xff] %v52
    // Predicated region
    $region10: #{tpu_custom_call.1} parent=1 // pred_check
      _
    $region11: #{tpu_custom_call.1} parent=1 // pred_check_branch
      %56 = sbr.rel (0) target = $region13
    $region12: #{tpu_custom_call.1} parent=1 // pred_region
      %s58 = ssub.s32 256, 256
      %59 = vsyncadd [#allocation4], %s58
      %s61 = sshll.u32 [#allocation5], 4
      %s62 = int_to_ptr.vmem [resolvable:$true] %s61
      %64 = dma.vmem_to_hbm [thread:$0]  %s62, 256, %s1, [#allocation4]
    $region13: #{tpu_custom_call.1} parent=1 // pred_fallthru
      _
    // Predicated region
    $region14: #{tpu_custom_call.1} parent=1 // pred_check
      _
    $region15: #{tpu_custom_call.1} parent=1 // pred_check_branch
      %66 = sbr.rel (0) target = $region17
    $region16: #{tpu_custom_call.1} parent=1 // pred_region
      %67 = dma.done [#allocation4], 256
    $region17: #{tpu_custom_call.1} parent=1 // pred_fallthru
      _
    %68 = vsyncpa [#allocation3], 1
    %69 = vsyncpa [#allocation4], 1

</llo_original>
